<compile_context>
chip_gen: v5e
topology: v5e:2x2
jax: 0.10.0
libtpu: 0.0.40
codegen_flags: <defaults>
</compile_context>

<pallas_src>
import functools

import jax
import jax.numpy as jnp
from jax.experimental import pallas as pl
from jax.experimental.pallas import tpu as pltpu

LANES = 128            # lane width
ROW_TILE = 8           # f32 sublane tile height (partials are f32)
ROW_ALIGN = 32         # row alignment covering f32 / bf16 / int8 input tilings
TM_MAX = 2048          # rows per block -> 1 MiB per f32 input block


def _cdiv(a, b):
    return -(-a // b)


def _round_up(a, b):
    return _cdiv(a, b) * b


def _dice_partials_kernel(x_ref, t_ref, inter_ref, ssum_ref, tsum_ref, *, tm):
    """Per-block partial sums: intersection, sum(sigmoid(x)), sum(targets).

    Each grid step writes an (8, 128) lane/sublane-resident partial for its own
    output block; the final cross-lane reduction is done once in the wrapper.
    Padded elements were filled with x = -inf (sigmoid -> 0) and t = 0 by the
    wrapper, so no masking / control flow is needed here.
    """
    xf = x_ref[...].astype(jnp.float32)
    tf = t_ref[...].astype(jnp.float32)
    s = jax.nn.sigmoid(xf)
    r = tm // ROW_TILE
    # Tile-preserving reshape + leading-axis sum == pure VPU vreg adds.
    inter_ref[0] = jnp.sum((s * tf).reshape(r, ROW_TILE, LANES), axis=0)
    ssum_ref[0] = jnp.sum(s.reshape(r, ROW_TILE, LANES), axis=0)
    tsum_ref[0] = jnp.sum(tf.reshape(r, ROW_TILE, LANES), axis=0)


def dice_loss(inputs, targets, smooth=1.0):
    """Pallas TPU implementation of DiceLoss.forward."""
    x = inputs.reshape(-1)
    t = targets.reshape(-1)
    if not jnp.issubdtype(x.dtype, jnp.floating):
        x = x.astype(jnp.float32)
    n = x.shape[0]

    # Choose the tiling: nb blocks of tm rows x 128 lanes.
    rows = _cdiv(n, LANES)
    nb = max(1, _cdiv(rows, TM_MAX))
    tm = _round_up(_cdiv(rows, nb), ROW_ALIGN)
    n_rows = nb * tm
    pad = n_rows * LANES - n

    # Pad logits with -inf (sigmoid == 0) and targets with 0 so padded elements
    # contribute nothing to any of the three sums -> no in-kernel masking.
    if pad:
        x = jnp.pad(x, (0, pad), constant_values=-jnp.inf)
        t = jnp.pad(t, (0, pad))
    x = x.reshape(n_rows, LANES)
    t = t.reshape(n_rows, LANES)

    kernel = functools.partial(_dice_partials_kernel, tm=tm)

    part_shape = jax.ShapeDtypeStruct((nb, ROW_TILE, LANES), jnp.float32)
    part_spec = pl.BlockSpec((1, ROW_TILE, LANES), lambda i: (i, 0, 0))

    inter_p, ssum_p, tsum_p = pl.pallas_call(
        kernel,
        out_shape=(part_shape, part_shape, part_shape),
        grid=(nb,),
        in_specs=[
            pl.BlockSpec((tm, LANES), lambda i: (i, 0)),
            pl.BlockSpec((tm, LANES), lambda i: (i, 0)),
        ],
        out_specs=(part_spec, part_spec, part_spec),
        compiler_params=pltpu.CompilerParams(
            dimension_semantics=("parallel",),
            vmem_limit_bytes=64 * 1024 * 1024,
        ),
    )(x, t)

    # Tiny final cross-lane reduction + dice formula (outside the kernel).
    intersection = jnp.sum(inter_p)
    s_sum = jnp.sum(ssum_p)
    t_sum = jnp.sum(tsum_p)
    dice = (2.0 * intersection + float(smooth)) / (s_sum + t_sum + float(smooth))
    return 1.0 - dice


def dice_loss_ref(inputs, targets, smooth=1.0):
    s = jax.nn.sigmoid(inputs.astype(jnp.float32)).reshape(-1)
    t = targets.astype(jnp.float32).reshape(-1)
    inter = jnp.sum(s * t)
    dice = (2.0 * inter + smooth) / (jnp.sum(s) + jnp.sum(t) + smooth)
    return 1.0 - dice


if __name__ == "__main__":
    key = jax.random.PRNGKey(0)
    k1, k2, k3, k4 = jax.random.split(key, 4)

    # NCHW, like the PyTorch module would receive (logits + binary mask).
    x = jax.random.normal(k1, (2, 4, 16, 16), dtype=jnp.float32)
    tgt = (jax.random.uniform(k2, (2, 4, 16, 16)) > 0.5).astype(jnp.float32)
    loss = jax.block_until_ready(dice_loss(x, tgt))
    ref = jax.block_until_ready(dice_loss_ref(x, tgt))
    assert jnp.allclose(loss, ref, atol=1e-5, rtol=1e-5), (loss, ref)

    # Non-multiple-of-1024 numel: exercises the padded path.
    x2 = jax.random.normal(k3, (2, 1, 23, 17), dtype=jnp.float32)
    tgt2 = (jax.random.uniform(k4, (2, 1, 23, 17)) > 0.5).astype(jnp.float32)
    loss2 = jax.block_until_ready(dice_loss(x2, tgt2))
    ref2 = jax.block_until_ready(dice_loss_ref(x2, tgt2))
    assert jnp.allclose(loss2, ref2, atol=1e-5, rtol=1e-5), (loss2, ref2)

    print("KERNEL_OK")
</pallas_src>

<mosaic_0001>
module attributes {stable_mosaic.version = 11 : i64} {
  func.func @_dice_partials_kernel(%arg0: i32, %arg1: memref<32x128xf32, #tpu.memory_space<vmem>>, %arg2: memref<32x128xf32, #tpu.memory_space<vmem>>, %arg3: memref<1x8x128xf32, #tpu.memory_space<vmem>>, %arg4: memref<1x8x128xf32, #tpu.memory_space<vmem>>, %arg5: memref<1x8x128xf32, #tpu.memory_space<vmem>>) attributes {dimension_semantics = [#tpu.dimension_semantics<parallel>], iteration_bounds = array<i64: 1>, scalar_prefetch = 0 : i64, scratch_operands = 0 : i64, tpu.core_type = #tpu.core_type<tc>, window_params = [{transform_indices = @transform_0, window_bounds = array<i64: 32, 128>}, {transform_indices = @transform_1, window_bounds = array<i64: 32, 128>}, {transform_indices = @transform_2, window_bounds = array<i64: 1, 8, 128>}, {transform_indices = @transform_3, window_bounds = array<i64: 1, 8, 128>}, {transform_indices = @transform_4, window_bounds = array<i64: 1, 8, 128>}]} {
    %c0 = arith.constant 0 : index
    %c0_0 = arith.constant 0 : index
    %0 = vector.load %arg1[%c0, %c0_0] : memref<32x128xf32, #tpu.memory_space<vmem>>, vector<32x128xf32>
    %c0_1 = arith.constant 0 : index
    %c0_2 = arith.constant 0 : index
    %1 = vector.load %arg2[%c0_1, %c0_2] : memref<32x128xf32, #tpu.memory_space<vmem>>, vector<32x128xf32>
    %2 = arith.negf %0 : vector<32x128xf32>
    %3 = math.exp %2 : vector<32x128xf32>
    %cst = arith.constant 1.000000e+00 : f32
    %4 = vector.broadcast %cst : f32 to vector<32x128xf32>
    %5 = arith.addf %4, %3 : vector<32x128xf32>
    %6 = arith.divf %4, %5 : vector<32x128xf32>
    %7 = arith.mulf %6, %1 : vector<32x128xf32>
    %8 = vector.shape_cast %7 : vector<32x128xf32> to vector<4x8x128xf32>
    %cst_3 = arith.constant dense<0.000000e+00> : vector<8x128xf32>
    %9 = vector.multi_reduction <add>, %8, %cst_3 [0] : vector<4x8x128xf32> to vector<8x128xf32>
    %c0_4 = arith.constant 0 : index
    %c0_5 = arith.constant 0 : index
    %c0_6 = arith.constant 0 : index
    %10 = vector.load %arg3[%c0_4, %c0_5, %c0_6] : memref<1x8x128xf32, #tpu.memory_space<vmem>>, vector<1x8x128xf32>
    %11 = vector.shape_cast %10 : vector<1x8x128xf32> to vector<8x128xf32>
    %12 = vector.shape_cast %9 : vector<8x128xf32> to vector<1x8x128xf32>
    tpu.vector_store %arg3[%c0_4, %c0_5, %c0_6], %12 {strides = array<i32>} : memref<1x8x128xf32, #tpu.memory_space<vmem>>, vector<1x8x128xf32>,
    %13 = vector.shape_cast %6 : vector<32x128xf32> to vector<4x8x128xf32>
    %cst_7 = arith.constant dense<0.000000e+00> : vector<8x128xf32>
    %14 = vector.multi_reduction <add>, %13, %cst_7 [0] : vector<4x8x128xf32> to vector<8x128xf32>
    %c0_8 = arith.constant 0 : index
    %c0_9 = arith.constant 0 : index
    %c0_10 = arith.constant 0 : index
    %15 = vector.load %arg4[%c0_8, %c0_9, %c0_10] : memref<1x8x128xf32, #tpu.memory_space<vmem>>, vector<1x8x128xf32>
    %16 = vector.shape_cast %15 : vector<1x8x128xf32> to vector<8x128xf32>
    %17 = vector.shape_cast %14 : vector<8x128xf32> to vector<1x8x128xf32>
    tpu.vector_store %arg4[%c0_8, %c0_9, %c0_10], %17 {strides = array<i32>} : memref<1x8x128xf32, #tpu.memory_space<vmem>>, vector<1x8x128xf32>,
    %18 = vector.shape_cast %1 : vector<32x128xf32> to vector<4x8x128xf32>
    %cst_11 = arith.constant dense<0.000000e+00> : vector<8x128xf32>
    %19 = vector.multi_reduction <add>, %18, %cst_11 [0] : vector<4x8x128xf32> to vector<8x128xf32>
    %c0_12 = arith.constant 0 : index
    %c0_13 = arith.constant 0 : index
    %c0_14 = arith.constant 0 : index
    %20 = vector.load %arg5[%c0_12, %c0_13, %c0_14] : memref<1x8x128xf32, #tpu.memory_space<vmem>>, vector<1x8x128xf32>
    %21 = vector.shape_cast %20 : vector<1x8x128xf32> to vector<8x128xf32>
    %22 = vector.shape_cast %19 : vector<8x128xf32> to vector<1x8x128xf32>
    tpu.vector_store %arg5[%c0_12, %c0_13, %c0_14], %22 {strides = array<i32>} : memref<1x8x128xf32, #tpu.memory_space<vmem>>, vector<1x8x128xf32>,
    return
  }
  func.func @transform_0(%arg0: i32) -> (i32, i32) {
    %c0_i32 = arith.constant 0 : i32
    %c0_i32_0 = arith.constant 0 : i32
    return %arg0, %c0_i32 : i32, i32
  }
  func.func @transform_1(%arg0: i32) -> (i32, i32) {
    %c0_i32 = arith.constant 0 : i32
    %c0_i32_0 = arith.constant 0 : i32
    return %arg0, %c0_i32 : i32, i32
  }
  func.func @transform_2(%arg0: i32) -> (i32, i32, i32) {
    %c0_i32 = arith.constant 0 : i32
    %c0_i32_0 = arith.constant 0 : i32
    %c0_i32_1 = arith.constant 0 : i32
    return %arg0, %c0_i32, %c0_i32_0 : i32, i32, i32
  }
  func.func @transform_3(%arg0: i32) -> (i32, i32, i32) {
    %c0_i32 = arith.constant 0 : i32
    %c0_i32_0 = arith.constant 0 : i32
    %c0_i32_1 = arith.constant 0 : i32
    return %arg0, %c0_i32, %c0_i32_0 : i32, i32, i32
  }
  func.func @transform_4(%arg0: i32) -> (i32, i32, i32) {
    %c0_i32 = arith.constant 0 : i32
    %c0_i32_0 = arith.constant 0 : i32
    %c0_i32_1 = arith.constant 0 : i32
    return %arg0, %c0_i32, %c0_i32_0 : i32, i32, i32
  }
}

</mosaic_0001>

<llo_original>
// kernel: tpu_custom_call.1
$region0: #{tpu_custom_call.1}
  #allocation0 [shape = 'u32[]', space=smem, size = 0x4, offset = 0x4, fixed_abs, tag = 'smem constant byte address 0x4 - core index']
  #allocation1 [shape = 'u32[72,128]{1,0:T(1,128)}', space=vmem, size = 0x9000, scoped, tag = 'internal scratch']
  %s0 = inlined_call_operand.hbm [shape: f32[32,128], index: 0, kind: input, shape index: {}]
  %s1 = inlined_call_operand.hbm [shape: f32[32,128], index: 1, kind: input, shape index: {}]
  %s2 = inlined_call_operand.hbm [shape: f32[1,8,128], index: 2, kind: output, shape index: {0}]
  %s3 = inlined_call_operand.hbm [shape: f32[1,8,128], index: 3, kind: output, shape index: {1}]
  %s4 = inlined_call_operand.hbm [shape: f32[1,8,128], index: 4, kind: output, shape index: {2}]
  %5 = xla_tuple %s2, %s3, %s4
  %s6 = sld [smem:[#allocation0]]
  $region42: #{tpu_custom_call.1} parent=0
    _
  %s8 = ssub.s32 1, %s6
  %s9 = scalar_select 0, %s8, %s6
  $region1: #{tpu_custom_call.1} parent=0
    #allocation2 [shape = 'u8[16384]{0}', space=vmem, size = 0x4000, scoped, tag = 'input window, operand 0, single buffered']
    #allocation3 [shape = 's32[1]{0}', space=sflag, size = 0x4, scoped, tag = 'scoped memory for tpu_custom_call.1']
    #allocation4 [shape = 's32[1]{0}', space=sflag, size = 0x4, scoped, tag = 'scoped memory for tpu_custom_call.1']
    #allocation5 [shape = 'u8[16384]{0}', space=vmem, size = 0x4000, scoped, tag = 'input window, operand 1, single buffered']
    #allocation6 [shape = 's32[1]{0}', space=sflag, size = 0x4, scoped, tag = 'scoped memory for tpu_custom_call.1']
    #allocation7 [shape = 'u8[4096]{0}', space=vmem, size = 0x1000, scoped, tag = 'output window, operand 0, single buffered']
    #allocation8 [shape = 'u8[4096]{0}', space=vmem, size = 0x1000, scoped, tag = 'output window, operand 1, single buffered']
    #allocation9 [shape = 's32[1]{0}', space=sflag, size = 0x4, scoped, tag = 'scoped memory for tpu_custom_call.1']
    #allocation10 [shape = 'u8[4096]{0}', space=vmem, size = 0x1000, scoped, tag = 'output window, operand 2, single buffered']
    %10 = vsyncpa [#allocation3], 0
    %11 = vsyncpa [#allocation6], 0
    %12 = vsyncpa [#allocation4], 0
    %13 = vsyncpa [#allocation9], 0
    // Predicated region
    $region2: #{tpu_custom_call.1} parent=1 // pred_check
      _
    $region3: #{tpu_custom_call.1} parent=1 // pred_check_branch
      %15 = sbr.rel (0) target = $region5
    $region4: #{tpu_custom_call.1} parent=1 // pred_region
      %17 = vsyncadd [#allocation3], 0
      %s18 = sshll.u32 %s0, 4
      %s19 = int_to_ptr.hbm [resolvable:$true] %s18
      %s20 = sshll.u32 [#allocation2], 4
      %s21 = int_to_ptr.vmem [resolvable:$true] %s20
      %26 = dma.hbm_to_vmem [thread:$0]  %s19, 512, %s21, [#allocation3], 128, 128, 8
    $region5: #{tpu_custom_call.1} parent=1 // pred_fallthru
      _
    // Predicated region
    $region6: #{tpu_custom_call.1} parent=1 // pred_check
      _
    $region7: #{tpu_custom_call.1} parent=1 // pred_check_branch
      %28 = sbr.rel (0) target = $region9
    $region8: #{tpu_custom_call.1} parent=1 // pred_region
      %30 = vsyncadd [#allocation6], 0
      %s31 = sshll.u32 %s1, 4
      %s32 = int_to_ptr.hbm [resolvable:$true] %s31
      %s33 = sshll.u32 [#allocation5], 4
      %s34 = int_to_ptr.vmem [resolvable:$true] %s33
      %39 = dma.hbm_to_vmem [thread:$0]  %s32, 512, %s34, [#allocation6], 128, 128, 8
    $region9: #{tpu_custom_call.1} parent=1 // pred_fallthru
      _
    // Predicated region
    $region10: #{tpu_custom_call.1} parent=1 // pred_check
      _
    $region11: #{tpu_custom_call.1} parent=1 // pred_check_branch
      %41 = sbr.rel (0) target = $region13
    $region12: #{tpu_custom_call.1} parent=1 // pred_region
      %43 = dma.done [#allocation3], 512
    $region13: #{tpu_custom_call.1} parent=1 // pred_fallthru
      _
    // Predicated region
    $region14: #{tpu_custom_call.1} parent=1 // pred_check
      _
    $region15: #{tpu_custom_call.1} parent=1 // pred_check_branch
      %45 = sbr.rel (0) target = $region17
    $region16: #{tpu_custom_call.1} parent=1 // pred_region
      %47 = dma.done [#allocation6], 512
    $region17: #{tpu_custom_call.1} parent=1 // pred_fallthru
      _
    %v48 = vld [vmem:[#allocation2] sm:$0xff]
    %v49 = vld [vmem:[#allocation2 + $0x8] sm:$0xff]
    %v50 = vld [vmem:[#allocation2 + $0x10] sm:$0xff]
    %v51 = vld [vmem:[#allocation2 + $0x18] sm:$0xff]
    %v52 = vld [vmem:[#allocation5] sm:$0xff]
    %v53 = vld [vmem:[#allocation5 + $0x8] sm:$0xff]
    %v54 = vld [vmem:[#allocation5 + $0x10] sm:$0xff]
    %v55 = vld [vmem:[#allocation5 + $0x18] sm:$0xff]
    %v56 = vxor.u32 %v48, 2147483648
    %v57 = vxor.u32 %v49, 2147483648
    %v58 = vxor.u32 %v50, 2147483648
    %v59 = vxor.u32 %v51, 2147483648
    %v60 = vmul.f32 %v56, 1.442695
    %v61 = vpow.pop %v60
    %v62 = vmul.f32 %v57, 1.442695
    %v63 = vpow.pop %v62
    %v64 = vmul.f32 %v58, 1.442695
    %v65 = vpow.pop %v64
    %v66 = vmul.f32 %v59, 1.442695
    %v67 = vpow.pop %v66
    %v68 = vadd.f32 %v61, 1.0
    %v69 = vadd.f32 %v63, 1.0
    %v70 = vadd.f32 %v65, 1.0
    %v71 = vadd.f32 %v67, 1.0
    %v72 = vrcp.pop %v68
    %v73 = vmul.f32 %v68, %v72
    %v74 = vsub.f32 1.0, %v73
    %v75 = vmul.f32 %v72, %v74
    %v76 = vadd.f32 %v72, %v75
    %vm77 = vweird.f32 %v68
    %vm78 = vweird.f32 %v72
    %vm79 = vmor %vm77, %vm78
    %v80 = vsel %vm79, %v72, %v76
    %v81 = vand.u32 2147483647, %v68
    %vm82 = vcmp.eq.f32.partialorder %v81, 8.507059e+37
    %v83 = vand.u32 %v68, 2147483648
    %v84 = vor.u32 1.1754944e-38, %v83
    %v85 = vsel %vm82, %v84, %v80
    %v86 = vmul.f32 1.0, %v85
    %v87 = vrcp.pop %v69
    %v88 = vmul.f32 %v69, %v87
    %v89 = vsub.f32 1.0, %v88
    %v90 = vmul.f32 %v87, %v89
    %v91 = vadd.f32 %v87, %v90
    %vm92 = vweird.f32 %v69
    %vm93 = vweird.f32 %v87
    %vm94 = vmor %vm92, %vm93
    %v95 = vsel %vm94, %v87, %v91
    %v96 = vand.u32 2147483647, %v69
    %vm97 = vcmp.eq.f32.partialorder %v96, 8.507059e+37
    %v98 = vand.u32 %v69, 2147483648
    %v99 = vor.u32 1.1754944e-38, %v98
    %v100 = vsel %vm97, %v99, %v95
    %v101 = vmul.f32 1.0, %v100
    %v102 = vrcp.pop %v70
    %v103 = vmul.f32 %v70, %v102
    %v104 = vsub.f32 1.0, %v103
    %v105 = vmul.f32 %v102, %v104
    %v106 = vadd.f32 %v102, %v105
    %vm107 = vweird.f32 %v70
    %vm108 = vweird.f32 %v102
    %vm109 = vmor %vm107, %vm108
    %v110 = vsel %vm109, %v102, %v106
    %v111 = vand.u32 2147483647, %v70
    %vm112 = vcmp.eq.f32.partialorder %v111, 8.507059e+37
    %v113 = vand.u32 %v70, 2147483648
    %v114 = vor.u32 1.1754944e-38, %v113
    %v115 = vsel %vm112, %v114, %v110
    %v116 = vmul.f32 1.0, %v115
    %v117 = vrcp.pop %v71
    %v118 = vmul.f32 %v71, %v117
    %v119 = vsub.f32 1.0, %v118
    %v120 = vmul.f32 %v117, %v119
    %v121 = vadd.f32 %v117, %v120
    %vm122 = vweird.f32 %v71
    %vm123 = vweird.f32 %v117
    %vm124 = vmor %vm122, %vm123
    %v125 = vsel %vm124, %v117, %v121
    %v126 = vand.u32 2147483647, %v71
    %vm127 = vcmp.eq.f32.partialorder %v126, 8.507059e+37
    %v128 = vand.u32 %v71, 2147483648
    %v129 = vor.u32 1.1754944e-38, %v128
    %v130 = vsel %vm127, %v129, %v125
    %v131 = vmul.f32 1.0, %v130
    %v132 = vmul.f32 %v86, %v52
    %v133 = vmul.f32 %v101, %v53
    %v134 = vmul.f32 %v116, %v54
    %v135 = vmul.f32 %v131, %v55
    %v136 = vadd.f32 %v132, %v133
    %v137 = vadd.f32 %v136, %v134
    %v138 = vadd.f32 %v137, %v135
    %139 = vst [vmem:[#allocation7] sm:$0xff] %v138
    %v140 = vadd.f32 %v86, %v101
    %v141 = vadd.f32 %v140, %v116
    %v142 = vadd.f32 %v141, %v131
    %143 = vst [vmem:[#allocation8] sm:$0xff] %v142
    %v144 = vadd.f32 %v52, %v53
    %v145 = vadd.f32 %v144, %v54
    %v146 = vadd.f32 %v145, %v55
    %147 = vst [vmem:[#allocation10] sm:$0xff] %v146
    // Predicated region
    $region18: #{tpu_custom_call.1} parent=1 // pred_check
      _
    $region19: #{tpu_custom_call.1} parent=1 // pred_check_branch
      %149 = sbr.rel (0) target = $region21
    $region20: #{tpu_custom_call.1} parent=1 // pred_region
      %151 = vsyncadd [#allocation4], 0
      %s153 = sshll.u32 [#allocation7], 4
      %s154 = int_to_ptr.vmem [resolvable:$true] %s153
      %s155 = sshll.u32 %s2, 4
      %s156 = int_to_ptr.hbm [resolvable:$true] %s155
      %158 = dma.vmem_to_hbm [thread:$0]  %s154, 128, %s156, [#allocation4]
    $region21: #{tpu_custom_call.1} parent=1 // pred_fallthru
      _
    // Predicated region
    $region22: #{tpu_custom_call.1} parent=1 // pred_check
      _
    $region23: #{tpu_custom_call.1} parent=1 // pred_check_branch
      %160 = sbr.rel (0) target = $region25
    $region24: #{tpu_custom_call.1} parent=1 // pred_region
      %162 = vsyncadd [#allocation9], 0
      %s164 = sshll.u32 [#allocation8], 4
      %s165 = int_to_ptr.vmem [resolvable:$true] %s164
      %s166 = sshll.u32 %s3, 4
      %s167 = int_to_ptr.hbm [resolvable:$true] %s166
      %169 = dma.vmem_to_hbm [thread:$0]  %s165, 128, %s167, [#allocation9]
    $region25: #{tpu_custom_call.1} parent=1 // pred_fallthru
      _
    // Predicated region
    $region26: #{tpu_custom_call.1} parent=1 // pred_check
      _
    $region27: #{tpu_custom_call.1} parent=1 // pred_check_branch
      %171 = sbr.rel (0) target = $region29
    $region28: #{tpu_custom_call.1} parent=1 // pred_region
      %173 = vsyncadd [#allocation9], 0
      %s175 = sshll.u32 [#allocation10], 4
      %s176 = int_to_ptr.vmem [resolvable:$true] %s175
      %s177 = sshll.u32 %s4, 4
      %s178 = int_to_ptr.hbm [resolvable:$true] %s177
      %180 = dma.vmem_to_hbm [thread:$0]  %s176, 128, %s178, [#allocation9]
    $region29: #{tpu_custom_call.1} parent=1 // pred_fallthru
      _
    // Predicated region
    $region30: #{tpu_custom_call.1} parent=1 // pred_check
      _
    $region31: #{tpu_custom_call.1} parent=1 // pred_check_branch
      %182 = sbr.rel (0) target = $region33
    $region32: #{tpu_custom_call.1} parent=1 // pred_region
      %184 = dma.done [#allocation4], 128
    $region33: #{tpu_custom_call.1} parent=1 // pred_fallthru
      _
    // Predicated region
    $region34: #{tpu_custom_call.1} parent=1 // pred_check
      _
    $region35: #{tpu_custom_call.1} parent=1 // pred_check_branch
      %186 = sbr.rel (0) target = $region37
    $region36: #{tpu_custom_call.1} parent=1 // pred_region
      %188 = dma.done [#allocation9], 128
    $region37: #{tpu_custom_call.1} parent=1 // pred_fallthru
      _
    // Predicated region
    $region38: #{tpu_custom_call.1} parent=1 // pred_check
      _
    $region39: #{tpu_custom_call.1} parent=1 // pred_check_branch
      %190 = sbr.rel (0) target = $region41
    $region40: #{tpu_custom_call.1} parent=1 // pred_region
      %192 = dma.done [#allocation9], 128
    $region41: #{tpu_custom_call.1} parent=1 // pred_fallthru
      _
    %193 = vsyncpa [#allocation3], 1
    %194 = vsyncpa [#allocation6], 1
    %195 = vsyncpa [#allocation4], 1
    %196 = vsyncpa [#allocation9], 1

</llo_original>
